<compile_context>
chip_gen: v5e
topology: v5e:2x2
jax: 0.10.0
libtpu: 0.0.40
codegen_flags: <defaults>
</compile_context>

<pallas_src>
import functools

import jax
import jax.numpy as jnp
from jax import lax
from jax.experimental import pallas as pl
from jax.experimental.pallas import tpu as pltpu


def _dwconv1d_kernel(x_ref, h_ref, w_ref, o_ref, *, K, pad_left, mult, Ls):
    """One (batch, length-tile) block of a stride-1 depthwise conv.

    x_ref: (1, C_in, W)        core input columns of this tile
    h_ref: (1, 1, C_in, Hw)    K-1 halo columns (left + right neighbours / zeros)
    w_ref: (K, C_out, 1)            if mult == 1
           (K, C_in, mult, 1)       if mult  > 1
    o_ref: (1, C_out, T)            if mult == 1
           (1, C_in, mult, T)       if mult  > 1
    """
    l = pl.program_id(1)
    W = x_ref.shape[-1]
    T = o_ref.shape[-1]

    x = x_ref[0].astype(jnp.float32)                       # (C_in, W)
    # Zero columns past the true end of the input slab: implements the right
    # zero-padding of the conv and masks the garbage tail of a partial block.
    col = l * W + lax.broadcasted_iota(jnp.int32, (1, W), 1)
    x = jnp.where(col < Ls, x, 0.0)

    if K > 1:
        h = h_ref[0, 0].astype(jnp.float32)                # (C_in, K - 1)
        parts = []
        if pad_left > 0:
            parts.append(h[:, :pad_left])                  # left zero-pad / neighbour
        parts.append(x)
        if K - 1 - pad_left > 0:
            parts.append(h[:, pad_left:])                  # right neighbour / zero-pad
        xw = jnp.concatenate(parts, axis=-1) if len(parts) > 1 else x
    else:
        xw = x                                             # (C_in, W + K - 1)

    acc = jnp.zeros(o_ref.shape[1:], jnp.float32)
    if mult == 1:
        for k in range(K):                                 # K is small: unrolled taps
            win = lax.slice_in_dim(xw, k, k + T, axis=1)   # (C_out, T)
            acc = acc + w_ref[k].astype(jnp.float32) * win
    else:
        for k in range(K):
            win = lax.slice_in_dim(xw, k, k + T, axis=1)[:, None, :]   # (C_in, 1, T)
            acc = acc + w_ref[k].astype(jnp.float32) * win             # (C_in, mult, T)
    o_ref[0] = acc.astype(o_ref.dtype)


def _dwconv1d_stride1(xs, w2d, out_L, pad_left, mult):
    """Stride-1 depthwise conv core.

    xs:  (N, C_in, Ls) input slab; output t = sum_k w[:, k] * xtilde[t - pad_left + k]
         where xtilde zero-extends xs on both sides.
    w2d: (C_out, K) taps (C_out = C_in * mult, PyTorch channel order c*mult + m).
    """
    N, C_in, Ls = xs.shape
    C_out, K = w2d.shape
    dtype = xs.dtype

    # ---- length tiling: lane-dense multiples of 128, sized for VMEM --------
    if out_L >= 128:
        t_l = min(1024, 128 * (out_L // 128))
        # double-buffered input + output blocks comfortably inside scoped VMEM
        while t_l > 128 and 8 * C_in * (1 + mult) * t_l > (8 << 20):
            t_l -= 128
        l_blocks = pl.cdiv(out_L, t_l)
        out_lp = l_blocks * t_l
        wx = t_l                      # core x columns per tile (<= Ls)
    else:
        # Tiny problem: single block covering the full axes (no OOB blocks).
        t_l = out_L
        l_blocks = 1
        out_lp = out_L
        wx = Ls

    # ---- tiny halo side-input: the K-1 columns each tile needs beyond its core
    Hw = max(K - 1, 1)
    j = jnp.arange(Hw)
    off = jnp.where(j < pad_left, j - pad_left, wx + j - pad_left)
    col = jnp.arange(l_blocks)[:, None] * wx + off[None, :]          # (l_blocks, Hw)
    valid = (col >= 0) & (col < Ls) & (j[None, :] < (K - 1))
    colc = jnp.clip(col, 0, Ls - 1)
    halo = jnp.take(xs, colc.reshape(-1), axis=2).reshape(N, C_in, l_blocks, Hw)
    halo = jnp.where(valid[None, None], halo, jnp.zeros((), dtype))
    halo = jnp.moveaxis(halo, 2, 1)                                  # (N, l_blocks, C_in, Hw)

    # ---- weights preshaped so each tap broadcasts along lanes ---------------
    if mult == 1:
        wk = jnp.transpose(w2d, (1, 0))[:, :, None]                  # (K, C_out, 1)
        out_shape = jax.ShapeDtypeStruct((N, C_out, out_lp), dtype)
        out_spec = pl.BlockSpec((1, C_out, t_l), lambda n, l: (n, 0, l))
        w_spec = pl.BlockSpec((K, C_out, 1), lambda n, l: (0, 0, 0))
    else:
        wk = w2d.reshape(C_in, mult, K).transpose(2, 0, 1)[..., None]  # (K, C_in, mult, 1)
        out_shape = jax.ShapeDtypeStruct((N, C_in, mult, out_lp), dtype)
        out_spec = pl.BlockSpec((1, C_in, mult, t_l), lambda n, l: (n, 0, 0, l))
        w_spec = pl.BlockSpec((K, C_in, mult, 1), lambda n, l: (0, 0, 0, 0))

    kernel = functools.partial(
        _dwconv1d_kernel, K=K, pad_left=pad_left, mult=mult, Ls=Ls)

    out = pl.pallas_call(
        kernel,
        out_shape=out_shape,
        grid_spec=pltpu.PrefetchScalarGridSpec(
            num_scalar_prefetch=0,
            grid=(N, l_blocks),
            in_specs=[
                pl.BlockSpec((1, C_in, wx), lambda n, l: (n, 0, l)),
                pl.BlockSpec((1, 1, C_in, Hw), lambda n, l: (n, l, 0, 0)),
                w_spec,
            ],
            out_specs=out_spec,
        ),
        compiler_params=pltpu.CompilerParams(
            dimension_semantics=("parallel", "parallel"),
            vmem_limit_bytes=32 * 1024 * 1024,
        ),
    )(xs, halo, wk)

    if mult > 1:
        out = out.reshape(N, C_out, out_lp)      # bitcast: merges adjacent dims
    if out_lp != out_L:
        out = out[:, :, :out_L]
    return out


def depthwise_conv1d(x, weight, *, stride=1, padding=-1):
    """Depthwise Conv1d matching nn.Conv1d(C_in, C_out, K, groups=C_in, bias=False).

    x:      (N, C_in, L)
    weight: (C_out, 1, K)   (PyTorch grouped-conv weight layout, C_out % C_in == 0)
    """
    N, C_in, L = x.shape
    C_out, wc, K = weight.shape
    assert wc == 1 and C_out % C_in == 0
    mult = C_out // C_in
    pad = (K - 1) // 2 if padding == -1 else padding
    out_L = (L + 2 * pad - K) // stride + 1
    assert out_L > 0
    w2d = weight[:, 0, :]                                   # (C_out, K)

    if stride == 1 and 2 * pad <= K - 1:
        # Fast path: no jnp.pad copy of x; padding handled via halo + in-kernel mask.
        return _dwconv1d_stride1(x, w2d, out_L, pad, mult)

    # stride > 1 (or oversized padding): decompose into stride-1 phase convs in
    # the wrapper so the kernel never sees lane-strided slices.
    xq = jnp.pad(x, ((0, 0), (0, 0), (pad, pad)))
    out = None
    for r in range(min(stride, K)):
        xs_r = xq[:, :, r::stride] if stride > 1 else xq
        w_r = w2d[:, r::stride] if stride > 1 else w2d
        o_r = _dwconv1d_stride1(xs_r, w_r, out_L, 0, mult)
        out = o_r if out is None else out + o_r
    return out


def _reference(x, weight, *, stride=1, padding=-1):
    C_in = x.shape[1]
    K = weight.shape[-1]
    pad = (K - 1) // 2 if padding == -1 else padding
    return lax.conv_general_dilated(
        x, weight,
        window_strides=(stride,),
        padding=[(pad, pad)],
        dimension_numbers=("NCH", "OIH", "NCH"),
        feature_group_count=C_in,
    )


if __name__ == "__main__":
    key = jax.random.PRNGKey(0)
    k1, k2, k3, k4 = jax.random.split(key, 4)

    # Module-consistent small case: in_channels=4, out_channels=8 (depth mult 2),
    # kernel_size=3, stride=1, padding=-1 (-> (K-1)//2), bias=False.
    N, C_in, L = 2, 4, 16
    C_out, K = 8, 3
    x = jax.random.normal(k1, (N, C_in, L), dtype=jnp.float32)
    w = jax.random.normal(k2, (C_out, 1, K), dtype=jnp.float32) * 0.1

    out = depthwise_conv1d(x, w, stride=1, padding=-1)
    out = jax.block_until_ready(out)
    ref = _reference(x, w, stride=1, padding=-1)
    assert out.shape == ref.shape, (out.shape, ref.shape)
    assert jnp.allclose(out, ref, atol=1e-5, rtol=1e-5), float(jnp.max(jnp.abs(out - ref)))

    # Longer sequence (mult=1): exercises the lane-dense multi-tile path with halos.
    x2 = jax.random.normal(k3, (2, 8, 300), dtype=jnp.float32)
    w2 = jax.random.normal(k4, (8, 1, 3), dtype=jnp.float32) * 0.1
    out2 = jax.block_until_ready(depthwise_conv1d(x2, w2, stride=1, padding=-1))
    ref2 = _reference(x2, w2, stride=1, padding=-1)
    assert out2.shape == ref2.shape
    assert jnp.allclose(out2, ref2, atol=1e-5, rtol=1e-5), float(jnp.max(jnp.abs(out2 - ref2)))

    # stride=2: exercises the wrapper-side phase decomposition (no in-kernel lane strides).
    out3 = jax.block_until_ready(depthwise_conv1d(x2, w2, stride=2, padding=-1))
    ref3 = _reference(x2, w2, stride=2, padding=-1)
    assert out3.shape == ref3.shape
    assert jnp.allclose(out3, ref3, atol=1e-5, rtol=1e-5), float(jnp.max(jnp.abs(out3 - ref3)))

    print("KERNEL_OK")
</pallas_src>

<mosaic_0001>
module attributes {stable_mosaic.version = 11 : i64} {
  func.func @_dwconv1d_kernel(%arg0: i32, %arg1: i32, %arg2: memref<1x4x16xf32, #tpu.memory_space<vmem>>, %arg3: memref<1x1x4x2xf32, #tpu.memory_space<vmem>>, %arg4: memref<3x4x2x1xf32, #tpu.memory_space<vmem>>, %arg5: memref<1x4x2x16xf32, #tpu.memory_space<vmem>>) attributes {dimension_semantics = [#tpu.dimension_semantics<parallel>, #tpu.dimension_semantics<parallel>], iteration_bounds = array<i64: 2, 1>, scalar_prefetch = 0 : i64, scratch_operands = 0 : i64, tpu.core_type = #tpu.core_type<tc>, window_params = [{transform_indices = @transform_0, window_bounds = array<i64: 1, 4, 16>}, {transform_indices = @transform_1, window_bounds = array<i64: 1, 1, 4, 2>}, {pipeline_mode = #tpu.pipeline_mode<synchronous>, transform_indices = @transform_2, window_bounds = array<i64: 3, 4, 2, 1>}, {transform_indices = @transform_3, window_bounds = array<i64: 1, 4, 2, 16>}]} {
    %c0 = arith.constant 0 : index
    %c0_0 = arith.constant 0 : index
    %c0_1 = arith.constant 0 : index
    %0 = vector.load %arg2[%c0, %c0_0, %c0_1] : memref<1x4x16xf32, #tpu.memory_space<vmem>>, vector<1x4x16xf32>
    %1 = vector.shape_cast %0 : vector<1x4x16xf32> to vector<4x16xf32>
    %c16_i32 = arith.constant 16 : i32
    %2 = arith.muli %arg1, %c16_i32 : i32
    %3 = tpu.iota {dimensions = array<i32: 1>} : vector<1x16xi32>
    %4 = vector.broadcast %2 : i32 to vector<1x16xi32>
    %5 = arith.addi %4, %3 : vector<1x16xi32>
    %c16_i32_2 = arith.constant 16 : i32
    %6 = vector.broadcast %c16_i32_2 : i32 to vector<1x16xi32>
    %7 = arith.cmpi slt, %5, %6 : vector<1x16xi32>
    %cst = arith.constant 0.000000e+00 : f32
    %8 = vector.shape_cast %7 : vector<1x16xi1> to vector<1x16xi1>
    %9 = vector.broadcast %8 : vector<1x16xi1> to vector<4x16xi1>
    %10 = vector.broadcast %cst : f32 to vector<4x16xf32>
    %11 = arith.select %9, %1, %10 : vector<4x16xi1>, vector<4x16xf32>
    %c0_3 = arith.constant 0 : index
    %c0_4 = arith.constant 0 : index
    %c0_5 = arith.constant 0 : index
    %c0_6 = arith.constant 0 : index
    %12 = vector.load %arg3[%c0_3, %c0_4, %c0_5, %c0_6] : memref<1x1x4x2xf32, #tpu.memory_space<vmem>>, vector<1x1x4x2xf32>
    %13 = vector.shape_cast %12 : vector<1x1x4x2xf32> to vector<4x2xf32>
    %14 = vector.extract_strided_slice %13 {offsets = [0, 0], sizes = [4, 1], strides = [1, 1]} : vector<4x2xf32> to vector<4x1xf32>
    %15 = vector.extract_strided_slice %13 {offsets = [0, 1], sizes = [4, 1], strides = [1, 1]} : vector<4x2xf32> to vector<4x1xf32>
    %16 = tpu.concatenate %14, %11, %15 in 1 : vector<4x1xf32>, vector<4x16xf32>, vector<4x1xf32> -> vector<4x18xf32>
    %cst_7 = arith.constant 0.000000e+00 : f32
    %17 = vector.broadcast %cst_7 : f32 to vector<4x2x16xf32>
    %18 = vector.extract_strided_slice %16 {offsets = [0, 0], sizes = [4, 16], strides = [1, 1]} : vector<4x18xf32> to vector<4x16xf32>
    %19 = vector.shape_cast %18 : vector<4x16xf32> to vector<4x1x16xf32>
    %c0_8 = arith.constant 0 : index
    %c0_9 = arith.constant 0 : index
    %c0_10 = arith.constant 0 : index
    %c0_11 = arith.constant 0 : index
    %20 = vector.load %arg4[%c0_8, %c0_9, %c0_10, %c0_11] : memref<3x4x2x1xf32, #tpu.memory_space<vmem>>, vector<1x4x2x1xf32>
    %21 = vector.shape_cast %20 : vector<1x4x2x1xf32> to vector<4x2x1xf32>
    %22 = vector.broadcast %21 : vector<4x2x1xf32> to vector<4x2x16xf32>
    %23 = vector.broadcast %19 : vector<4x1x16xf32> to vector<4x2x16xf32>
    %24 = arith.mulf %22, %23 : vector<4x2x16xf32>
    %25 = arith.addf %17, %24 : vector<4x2x16xf32>
    %26 = vector.extract_strided_slice %16 {offsets = [0, 1], sizes = [4, 16], strides = [1, 1]} : vector<4x18xf32> to vector<4x16xf32>
    %27 = vector.shape_cast %26 : vector<4x16xf32> to vector<4x1x16xf32>
    %c1 = arith.constant 1 : index
    %c0_12 = arith.constant 0 : index
    %c0_13 = arith.constant 0 : index
    %c0_14 = arith.constant 0 : index
    %28 = vector.load %arg4[%c1, %c0_12, %c0_13, %c0_14] : memref<3x4x2x1xf32, #tpu.memory_space<vmem>>, vector<1x4x2x1xf32>
    %29 = vector.shape_cast %28 : vector<1x4x2x1xf32> to vector<4x2x1xf32>
    %30 = vector.broadcast %29 : vector<4x2x1xf32> to vector<4x2x16xf32>
    %31 = vector.broadcast %27 : vector<4x1x16xf32> to vector<4x2x16xf32>
    %32 = arith.mulf %30, %31 : vector<4x2x16xf32>
    %33 = arith.addf %25, %32 : vector<4x2x16xf32>
    %34 = vector.extract_strided_slice %16 {offsets = [0, 2], sizes = [4, 16], strides = [1, 1]} : vector<4x18xf32> to vector<4x16xf32>
    %35 = vector.shape_cast %34 : vector<4x16xf32> to vector<4x1x16xf32>
    %c2 = arith.constant 2 : index
    %c0_15 = arith.constant 0 : index
    %c0_16 = arith.constant 0 : index
    %c0_17 = arith.constant 0 : index
    %36 = vector.load %arg4[%c2, %c0_15, %c0_16, %c0_17] : memref<3x4x2x1xf32, #tpu.memory_space<vmem>>, vector<1x4x2x1xf32>
    %37 = vector.shape_cast %36 : vector<1x4x2x1xf32> to vector<4x2x1xf32>
    %38 = vector.broadcast %37 : vector<4x2x1xf32> to vector<4x2x16xf32>
    %39 = vector.broadcast %35 : vector<4x1x16xf32> to vector<4x2x16xf32>
    %40 = arith.mulf %38, %39 : vector<4x2x16xf32>
    %41 = arith.addf %33, %40 : vector<4x2x16xf32>
    %c0_18 = arith.constant 0 : index
    %c0_19 = arith.constant 0 : index
    %c0_20 = arith.constant 0 : index
    %c0_21 = arith.constant 0 : index
    %42 = vector.load %arg5[%c0_18, %c0_19, %c0_20, %c0_21] : memref<1x4x2x16xf32, #tpu.memory_space<vmem>>, vector<1x4x2x16xf32>
    %43 = vector.shape_cast %42 : vector<1x4x2x16xf32> to vector<4x2x16xf32>
    %44 = vector.shape_cast %41 : vector<4x2x16xf32> to vector<1x4x2x16xf32>
    tpu.vector_store %arg5[%c0_18, %c0_19, %c0_20, %c0_21], %44 {strides = array<i32>} : memref<1x4x2x16xf32, #tpu.memory_space<vmem>>, vector<1x4x2x16xf32>,
    return
  }
  func.func @transform_0(%arg0: i32, %arg1: i32) -> (i32, i32, i32) {
    %c0_i32 = arith.constant 0 : i32
    %c0_i32_0 = arith.constant 0 : i32
    return %arg0, %c0_i32, %arg1 : i32, i32, i32
  }
  func.func @transform_1(%arg0: i32, %arg1: i32) -> (i32, i32, i32, i32) {
    %c0_i32 = arith.constant 0 : i32
    %c0_i32_0 = arith.constant 0 : i32
    %c0_i32_1 = arith.constant 0 : i32
    return %arg0, %arg1, %c0_i32, %c0_i32_0 : i32, i32, i32, i32
  }
  func.func @transform_2(%arg0: i32, %arg1: i32) -> (i32, i32, i32, i32) {
    %c0_i32 = arith.constant 0 : i32
    %c0_i32_0 = arith.constant 0 : i32
    %c0_i32_1 = arith.constant 0 : i32
    %c0_i32_2 = arith.constant 0 : i32
    %c0_i32_3 = arith.constant 0 : i32
    return %c0_i32, %c0_i32_0, %c0_i32_1, %c0_i32_2 : i32, i32, i32, i32
  }
  func.func @transform_3(%arg0: i32, %arg1: i32) -> (i32, i32, i32, i32) {
    %c0_i32 = arith.constant 0 : i32
    %c0_i32_0 = arith.constant 0 : i32
    %c0_i32_1 = arith.constant 0 : i32
    return %arg0, %c0_i32, %c0_i32_0, %arg1 : i32, i32, i32, i32
  }
}

</mosaic_0001>

<llo_original>
// kernel: tpu_custom_call.1
$region0: #{tpu_custom_call.1}
  #allocation0 [shape = 'u32[]', space=smem, size = 0x4, offset = 0x4, fixed_abs, tag = 'smem constant byte address 0x4 - core index']
  #allocation1 [shape = 'u32[72,128]{1,0:T(1,128)}', space=vmem, size = 0x9000, scoped, tag = 'internal scratch']
  %s0 = inlined_call_operand.vmem [shape: f32[2,4,16], index: 0, kind: input, shape index: {}]
  %s1 = inlined_call_operand.vmem [shape: f32[2,1,4,2], index: 1, kind: input, shape index: {}]
  %s2 = inlined_call_operand.vmem [shape: f32[3,4,2,1], index: 2, kind: input, shape index: {}]
  %s3 = inlined_call_operand.hbm [shape: f32[2,4,2,16], index: 3, kind: output, shape index: {}]
  %s4 = sld [smem:[#allocation0]]
  $region45: #{tpu_custom_call.1} parent=0
    _
  %s6 = ssub.s32 1, %s4
  %s7 = scalar_select 0, %s6, %s4
  $region1: #{tpu_custom_call.1} parent=0
    #allocation2 [shape = 'u8[8192]{0}', space=vmem, size = 0x2000, scoped, tag = 'output window, operand 0']
    #allocation3 [shape = 's32[2]{0}', space=sflag, size = 0x8, scoped, tag = 'scoped memory for tpu_custom_call.1']
    %8 = vsyncpa [#allocation3], 0
    %s9 = scalar_lea.sflag [#allocation3], 1
    %10 = vsyncpa %s9, 0
    loop: start=0, step=1, limit=4
    $region2: #{tpu_custom_call.1} parent=1 // loop_pre_header
      _
    $region3: #{tpu_custom_call.1} parent=1 // loop_header
      %s12 = sphi 0, %s16
      %p13 = scmp.ge.s32.totalorder %s12, 4
      %s19 = sphi 0, %s31
      %s20 = sphi 0, %s27
      %s21 = sphi 0, %s19
      %s22 = sphi 0, %s20
      %s23 = sphi 0, %s21
      %s24 = sphi 0, %s22
      %s36 = sphi 0, %s38
      %s39 = sphi 0, %s36
      %s40 = sphi 0, %s39
      %s56 = sphi 0, %s40
      %s64 = sphi 0, %s66
      %s67 = sphi 0, %s64
      %s68 = sphi 0, %s67
      %s84 = sphi 0, %s68
      %s88 = sphi 0, %s88
      %s90 = sphi 0, %s88
      %s91 = sphi 0, %s90
      %s105 = sphi 0, %s91
      %s113 = sphi 0, %s115
      %s116 = sphi 0, %s113
      %s117 = sphi 0, %s116
      %s133 = sphi 0, %s117
    $region4: #{tpu_custom_call.1} parent=1 // loop_header_branch
      %15 = sbr.rel (%p13) target = $region8
    $region5: #{tpu_custom_call.1} parent=1 // loop_body
      %s17 = ssub.s32 %s12, 1
      %s18 = ssub.s32 %s12, 2
      %s25 = sadd.s32 1, %s20
      %p26 = scmp.ge.s32.totalorder %s25, 1
      %s27 = scalar_select %p26, 0, %s25
      %s28 = sadd.s32 1, %s19
      %s29 = scalar_select %p26, %s28, %s19
      %p30 = scmp.ge.s32.totalorder %s29, 2
      %s31 = scalar_select %p30, 0, %s29
      %s32 = ssub.s32 %s19, %s31
      %s33 = ssub.s32 %s20, %s27
      %s34 = sor.u32 %s32, %s33
      %p35 = scmp.eq.s32.totalorder %s34, 0
      %s37 = sadd.s32 %s36, 1
      %s38 = scalar_select %p35, %s36, %s37
      %p41 = pneg %p35
      %p42 = scmp.eq.s32.totalorder %s12, 1
      %p43 = por %p41, %p42
      %p44 = scmp.ne.s32.totalorder %s36, %s39
      %p45 = scmp.eq.s32.totalorder %s12, 0
      %p46 = por %p44, %p45
      %p47 = scmp.ne.s32.totalorder %s36, %s39
      %p48 = scmp.eq.s32.totalorder %s17, 1
      %p49 = por %p47, %p48
      %p50 = scmp.ne.s32.totalorder %s39, %s40
      %p51 = scmp.eq.s32.totalorder %s17, 0
      %p52 = por %p50, %p51
      %p53 = scmp.ne.s32.totalorder %s39, %s40
      %p54 = scmp.eq.s32.totalorder %s18, 1
      %p55 = por %p53, %p54
      %p57 = scmp.ne.s32.totalorder %s40, %s56
      %p58 = scmp.eq.s32.totalorder %s18, 0
      %p59 = por %p57, %p58
      %s60 = ssub.s32 %s19, %s31
      %s61 = ssub.s32 %s20, %s27
      %s62 = sor.u32 %s60, %s61
      %p63 = scmp.eq.s32.totalorder %s62, 0
      %s65 = sadd.s32 %s64, 1
      %s66 = scalar_select %p63, %s64, %s65
      %p69 = pneg %p63
      %p70 = scmp.eq.s32.totalorder %s12, 1
      %p71 = por %p69, %p70
      %p72 = scmp.ne.s32.totalorder %s64, %s67
      %p73 = scmp.eq.s32.totalorder %s12, 0
      %p74 = por %p72, %p73
      %p75 = scmp.ne.s32.totalorder %s64, %s67
      %p76 = scmp.eq.s32.totalorder %s17, 1
      %p77 = por %p75, %p76
      %p78 = scmp.ne.s32.totalorder %s67, %s68
      %p79 = scmp.eq.s32.totalorder %s17, 0
      %p80 = por %p78, %p79
      %p81 = scmp.ne.s32.totalorder %s67, %s68
      %p82 = scmp.eq.s32.totalorder %s18, 1
      %p83 = por %p81, %p82
      %p85 = scmp.ne.s32.totalorder %s68, %s84
      %p86 = scmp.eq.s32.totalorder %s18, 0
      %p87 = por %p85, %p86
      %s89 = sadd.s32 %s88, 1
      %p92 = scmp.eq.s32.totalorder %s12, 1
      %p93 = scmp.ne.s32.totalorder %s88, %s90
      %p94 = scmp.eq.s32.totalorder %s12, 0
      %p95 = por %p93, %p94
      %p96 = scmp.ne.s32.totalorder %s88, %s90
      %p97 = scmp.eq.s32.totalorder %s17, 1
      %p98 = por %p96, %p97
      %p99 = scmp.ne.s32.totalorder %s90, %s91
      %p100 = scmp.eq.s32.totalorder %s17, 0
      %p101 = por %p99, %p100
      %p102 = scmp.ne.s32.totalorder %s90, %s91
      %p103 = scmp.eq.s32.totalorder %s18, 1
      %p104 = por %p102, %p103
      %p106 = scmp.ne.s32.totalorder %s91, %s105
      %p107 = scmp.eq.s32.totalorder %s18, 0
      %p108 = por %p106, %p107
      %s109 = ssub.s32 %s19, %s31
      %s110 = ssub.s32 %s20, %s27
      %s111 = sor.u32 %s109, %s110
      %p112 = scmp.eq.s32.totalorder %s111, 0
      %s114 = sadd.s32 %s113, 1
      %s115 = scalar_select %p112, %s113, %s114
      %p118 = pneg %p112
      %p119 = scmp.eq.s32.totalorder %s12, 1
      %p120 = por %p118, %p119
      %p121 = scmp.ne.s32.totalorder %s113, %s116
      %p122 = scmp.eq.s32.totalorder %s12, 0
      %p123 = por %p121, %p122
      %p124 = scmp.ne.s32.totalorder %s113, %s116
      %p125 = scmp.eq.s32.totalorder %s17, 1
      %p126 = por %p124, %p125
      %p127 = scmp.ne.s32.totalorder %s116, %s117
      %p128 = scmp.eq.s32.totalorder %s17, 0
      %p129 = por %p127, %p128
      %p130 = scmp.ne.s32.totalorder %s116, %s117
      %p131 = scmp.eq.s32.totalorder %s18, 1
      %p132 = por %p130, %p131
      %p134 = scmp.ne.s32.totalorder %s117, %s133
      %p135 = scmp.eq.s32.totalorder %s18, 0
      %p136 = por %p134, %p135
      %p137 = scmp.le.s32.totalorder 1, %s12
      %p138 = scmp.lt.s32.totalorder %s12, 3
      %p139 = pnand %p137, %p138
      %p140 = pneg %p139
      // Predicated region
      $region9: #{tpu_custom_call.1} parent=5 // pred_check
        _
      $region10: #{tpu_custom_call.1} parent=5 // pred_check_branch
        %142 = sbr.rel (%p139) target = $region12
      $region11: #{tpu_custom_call.1} parent=5 // pred_region
        %s143 = ssub.s32 %s12, 1
        // Predicated region
        $region13: #{tpu_custom_call.1} parent=11 // pred_check
          %p144 = pneg %p101
        $region14: #{tpu_custom_call.1} parent=11 // pred_check_branch
          %146 = sbr.rel (%p144) target = $region16
        $region15: #{tpu_custom_call.1} parent=11 // pred_region
          _
        $region16: #{tpu_custom_call.1} parent=11 // pred_fallthru
          _
      $region12: #{tpu_custom_call.1} parent=5 // pred_fallthru
        _
      %p147 = scmp.lt.s32.totalorder %s12, 2
      // Predicated region
      $region17: #{tpu_custom_call.1} parent=5 // pred_check
        %p148 = pneg %p147
      $region18: #{tpu_custom_call.1} parent=5 // pred_check_branch
        %150 = sbr.rel (%p148) target = $region20
      $region19: #{tpu_custom_call.1} parent=5 // pred_region
        // Predicated region
        $region21: #{tpu_custom_call.1} parent=19 // pred_check
          %p151 = pneg %p46
        $region22: #{tpu_custom_call.1} parent=19 // pred_check_branch
          %153 = sbr.rel (%p151) target = $region24
        $region23: #{tpu_custom_call.1} parent=19 // pred_region
          %p154 = scmp.lt.s32.totalorder %s19, 1
          %s155 = scalar_select %p154, %s19, 1
          %p156 = scmp.lt.s32.totalorder %s20, 0
          %s157 = scalar_select %p156, %s20, 0
          %s158 = sadd.s32 %s157, %s155
          %s159 = smul.addr %s158, 4
          %s160 = scalar_lea.vmem %s0, %s159
        $region24: #{tpu_custom_call.1} parent=19 // pred_fallthru
          _
        // Predicated region
        $region25: #{tpu_custom_call.1} parent=19 // pred_check
          %p161 = pneg %p74
        $region26: #{tpu_custom_call.1} parent=19 // pred_check_branch
          %163 = sbr.rel (%p161) target = $region28
        $region27: #{tpu_custom_call.1} parent=19 // pred_region
          %p164 = scmp.lt.s32.totalorder %s19, 1
          %s165 = scalar_select %p164, %s19, 1
          %p166 = scmp.lt.s32.totalorder %s20, 0
          %s167 = scalar_select %p166, %s20, 0
          %s168 = sadd.s32 %s167, %s165
          %s169 = smul.addr %s168, 4
          %s170 = scalar_lea.vmem %s1, %s169
        $region28: #{tpu_custom_call.1} parent=19 // pred_fallthru
          _
      $region20: #{tpu_custom_call.1} parent=5 // pred_fallthru
        _
      %p171 = scmp.le.s32.totalorder 1, %s12
      %p172 = scmp.lt.s32.totalorder %s12, 3
      %p173 = pnand %p171, %p172
      %p174 = pneg %p173
      // Predicated region
      $region29: #{tpu_custom_call.1} parent=5 // pred_check
        _
      $region30: #{tpu_custom_call.1} parent=5 // pred_check_branch
        %176 = sbr.rel (%p173) target = $region32
      $region31: #{tpu_custom_call.1} parent=5 // pred_region
        %s177 = ssub.s32 %s12, 1
        %p178 = scmp.lt.s32.totalorder %s21, 1
        %s179 = scalar_select %p178, %s21, 1
        %p180 = scmp.lt.s32.totalorder %s22, 0
        %s181 = scalar_select %p180, %s22, 0
        %s182 = sadd.s32 %s181, %s179
        %s183 = smul.addr %s182, 4
        %s184 = scalar_lea.vmem %s0, %s183
        %p185 = pneg %p52
        %p186 = pneg %p49
        %p187 = scmp.lt.s32.totalorder %s21, 1
        %s188 = scalar_select %p187, %s21, 1
        %p189 = scmp.lt.s32.totalorder %s22, 0
        %s190 = scalar_select %p189, %s22, 0
        %s191 = sadd.s32 %s190, %s188
        %s192 = smul.addr %s191, 4
        %s193 = scalar_lea.vmem %s1, %s192
        %p194 = pneg %p80
        %p195 = pneg %p77
        %p196 = pneg %p101
        %p197 = pneg %p98
        %p198 = pneg %p129
        %p199 = pneg %p126
        %s200 = sand.u32 %s116, 1
        %s201 = scalar_lea.sflag [#allocation3], %s200
        %s202 = sand.u32 %s116, 1
        %s203 = smul.addr %s202, 8
        %s204 = scalar_lea.vmem [#allocation2], %s203
        %p205 = scmp.lt.s32.totalorder %s21, 1
        %s206 = scalar_select %p205, %s21, 1
        %p207 = scmp.lt.s32.totalorder %s22, 0
        %s208 = scalar_select %p207, %s22, 0
        %s209 = sadd.s32 %s208, %s206
        %s210 = smul.addr %s209, 4
        %s211 = scalar_lea.vmem %s0, %s210
        %p212 = scmp.lt.s32.totalorder %s21, 1
        %s213 = scalar_select %p212, %s21, 1
        %p214 = scmp.lt.s32.totalorder %s22, 0
        %s215 = scalar_select %p214, %s22, 0
        %s216 = sadd.s32 %s215, %s213
        %s217 = smul.addr %s216, 4
        %s218 = scalar_lea.vmem %s1, %s217
        %v219 = vld [vmem:[%s211] sm:$0xf]
        %s220 = smul.u32 %s22, 16
        %v221 = vlaneseq
        %v222 = vand.u32 %v221, 127
        %v223 = vstv %s220
        %v224 = vadd.s32 %v223, %v222
        %vm225 = vcmp.lt.s32.totalorder %v224, 16
        %v226 = vsel %vm225, 1, 0
        %vm227 = vcmp.eq.s32.totalorder %v226, 1
        %v228 = vsel %vm227, %v219, 0.0
        %v229 = vld [vmem:[%s218] sm:$0xf]
        %231 = vrot.lane.b32.xlu0 %v228, 1
        %v232 = vpop.permute.xlu0 %231
        %235 = vrot.lane.b32.xlu0 %v229, 16
        %v236 = vpop.permute.xlu0 %235
        %vm238 = vcmask 7168
        %v239 = vsel %vm238, %v229, %v232
        %vm240 = vcmask 138240
        %v241 = vsel %vm240, %v239, %v236
        %v243 = vrot.slane %v241, 1
        %v244 = vrot.slane %v241, 2
        %v245 = vrot.slane %v241, 3
        %v246 = vld [vmem:[%s2] sm:$0x3]
        %v247 = vld [vmem:[%s2 + $0x2] sm:$0x3]
        %v248 = vld [vmem:[%s2 + $0x4] sm:$0x3]
        %v249 = vld [vmem:[%s2 + $0x6] sm:$0x3]
        %251 = vset.pattern.permute.xlu0 0
        %252 = vperm.xlu0 %251, %v246
        %v253 = vpop.permute.xlu0 %252
        %256 = vset.pattern.permute.xlu0 0
        %257 = vperm.xlu0 %256, %v247
        %v258 = vpop.permute.xlu0 %257
        %261 = vset.pattern.permute.xlu0 0
        %262 = vperm.xlu0 %261, %v248
        %v263 = vpop.permute.xlu0 %262
        %266 = vset.pattern.permute.xlu0 0
        %267 = vperm.xlu0 %266, %v249
        %v268 = vpop.permute.xlu0 %267
        %v270 = vperm.slane %v241, 0
        %v271 = vperm.slane %v243, 0
        %v272 = vperm.slane %v244, 0
        %v273 = vperm.slane %v245, 0
        %v278 = vmul.f32 %v253, %v270
        %v279 = vmul.f32 %v258, %v271
        %v280 = vmul.f32 %v263, %v272
        %v281 = vmul.f32 %v268, %v273
        %v282 = vadd.f32 %v278, 0.0
        %v283 = vadd.f32 %v279, 0.0
        %v284 = vadd.f32 %v280, 0.0
        %v285 = vadd.f32 %v281, 0.0
        %s286 = scalar_lea.vmem %s2, 8
        %v287 = vld [vmem:[%s286] sm:$0x3]
        %v288 = vld [vmem:[%s286 + $0x2] sm:$0x3]
        %v289 = vld [vmem:[%s286 + $0x4] sm:$0x3]
        %v290 = vld [vmem:[%s286 + $0x6] sm:$0x3]
        %292 = vset.pattern.permute.xlu0 0
        %293 = vperm.xlu0 %292, %v287
        %v294 = vpop.permute.xlu0 %293
        %297 = vset.pattern.permute.xlu0 0
        %298 = vperm.xlu0 %297, %v288
        %v299 = vpop.permute.xlu0 %298
        %302 = vset.pattern.permute.xlu0 0
        %303 = vperm.xlu0 %302, %v289
        %v304 = vpop.permute.xlu0 %303
        %307 = vset.pattern.permute.xlu0 0
        %308 = vperm.xlu0 %307, %v290
        %v309 = vpop.permute.xlu0 %308
        %v311 = vmul.f32 %v294, %v270
        %v312 = vmul.f32 %v299, %v271
        %v313 = vmul.f32 %v304, %v272
        %v314 = vmul.f32 %v309, %v273
        %319 = vrot.lane.b32.xlu0 %v311, 127
        %v320 = vpop.permute.xlu0 %319
        %321 = vrot.lane.b32.xlu0 %v312, 127
        %v322 = vpop.permute.xlu0 %321
        %323 = vrot.lane.b32.xlu0 %v313, 127
        %v324 = vpop.permute.xlu0 %323
        %325 = vrot.lane.b32.xlu0 %v314, 127
        %v326 = vpop.permute.xlu0 %325
        %v331 = vadd.f32 %v282, %v320
        %v332 = vadd.f32 %v283, %v322
        %v333 = vadd.f32 %v284, %v324
        %v334 = vadd.f32 %v285, %v326
        %s335 = scalar_lea.vmem %s2, 16
        %v336 = vld [vmem:[%s335] sm:$0x3]
        %v337 = vld [vmem:[%s335 + $0x2] sm:$0x3]
        %v338 = vld [vmem:[%s335 + $0x4] sm:$0x3]
        %v339 = vld [vmem:[%s335 + $0x6] sm:$0x3]
        %341 = vset.pattern.permute.xlu0 0
        %342 = vperm.xlu0 %341, %v336
        %v343 = vpop.permute.xlu0 %342
        %346 = vset.pattern.permute.xlu0 0
        %347 = vperm.xlu0 %346, %v337
        %v348 = vpop.permute.xlu0 %347
        %351 = vset.pattern.permute.xlu0 0
        %352 = vperm.xlu0 %351, %v338
        %v353 = vpop.permute.xlu0 %352
        %356 = vset.pattern.permute.xlu0 0
        %357 = vperm.xlu0 %356, %v339
        %v358 = vpop.permute.xlu0 %357
        %v360 = vmul.f32 %v343, %v270
        %v361 = vmul.f32 %v348, %v271
        %v362 = vmul.f32 %v353, %v272
        %v363 = vmul.f32 %v358, %v273
        %368 = vrot.lane.b32.xlu0 %v360, 126
        %v369 = vpop.permute.xlu0 %368
        %370 = vrot.lane.b32.xlu0 %v361, 126
        %v371 = vpop.permute.xlu0 %370
        %372 = vrot.lane.b32.xlu0 %v362, 126
        %v373 = vpop.permute.xlu0 %372
        %374 = vrot.lane.b32.xlu0 %v363, 126
        %v375 = vpop.permute.xlu0 %374
        %v380 = vadd.f32 %v331, %v369
        %v381 = vadd.f32 %v332, %v371
        %v382 = vadd.f32 %v333, %v373
        %v383 = vadd.f32 %v334, %v375
        %vm384 = vcmask 123904
        %385 = vst.msk [vmem:[%s204] sm:$0x3] %vm384, %v380
        %386 = vst.msk [vmem:[%s204 + $0x2] sm:$0x3] %vm384, %v381
        %387 = vst.msk [vmem:[%s204 + $0x4] sm:$0x3] %vm384, %v382
        %388 = vst.msk [vmem:[%s204 + $0x6] sm:$0x3] %vm384, %v383
        %s389 = sand.u32 %s116, 1
        %s390 = scalar_lea.sflag [#allocation3], %s389
        %s391 = sand.u32 %s116, 1
        %s392 = smul.addr %s391, 8
        %s393 = scalar_lea.vmem [#allocation2], %s392
        // Predicated region
        $region33: #{tpu_custom_call.1} parent=31 // pred_check
          %p394 = pneg %p126
        $region34: #{tpu_custom_call.1} parent=31 // pred_check_branch
          %396 = sbr.rel (%p394) target = $region36
        $region35: #{tpu_custom_call.1} parent=31 // pred_region
          %398 = vsyncadd %s390, 0
          %s399 = smul.addr %s21, 4
          %s400 = sadd.s32 %s22, %s399
          %s401 = smul.addr %s400, 2
          %s402 = scalar_lea.hbm %s3, %s401
          %s403 = sshll.u32 %s393, 4
          %s404 = int_to_ptr.vmem [resolvable:$true] %s403
          %s405 = sshll.u32 %s402, 4
          %s406 = int_to_ptr.hbm [resolvable:$true] %s405
          %411 = dma.vmem_to_hbm [thread:$0]  %s404, 128, %s406, %s390, 32, 32, 2
        $region36: #{tpu_custom_call.1} parent=31 // pred_fallthru
          _
      $region32: #{tpu_custom_call.1} parent=5 // pred_fallthru
        _
      %p412 = scmp.le.s32.totalorder 2, %s12
      // Predicated region
      $region37: #{tpu_custom_call.1} parent=5 // pred_check
        %p413 = pneg %p412
      $region38: #{tpu_custom_call.1} parent=5 // pred_check_branch
        %415 = sbr.rel (%p413) target = $region40
      $region39: #{tpu_custom_call.1} parent=5 // pred_region
        %s416 = ssub.s32 %s12, 2
        // Predicated region
        $region41: #{tpu_custom_call.1} parent=39 // pred_check
          %p417 = pneg %p132
        $region42: #{tpu_custom_call.1} parent=39 // pred_check_branch
          %419 = sbr.rel (%p417) target = $region44
        $region43: #{tpu_custom_call.1} parent=39 // pred_region
          %s420 = sand.u32 %s117, 1
          %s421 = scalar_lea.sflag [#allocation3], %s420
          %s422 = sand.u32 %s117, 1
          %s423 = smul.addr %s422, 8
          %s424 = scalar_lea.vmem [#allocation2], %s423
          %426 = dma.done %s421, 128
        $region44: #{tpu_custom_call.1} parent=39 // pred_fallthru
          _
      $region40: #{tpu_custom_call.1} parent=5 // pred_fallthru
        _
    $region6: #{tpu_custom_call.1} parent=1 // loop_footer
      %s16 = sadd.s32 1, %s12
    $region7: #{tpu_custom_call.1} parent=1 // loop_footer_branch
      %11 = sbr.rel target = $region3
    $region8: #{tpu_custom_call.1} parent=1 // loop_exit
      _
    %427 = vsyncpa [#allocation3], 1
    %s428 = scalar_lea.sflag [#allocation3], 1
    %429 = vsyncpa %s428, 1

</llo_original>
